<compile_context>
chip_gen: v6e
topology: v6e:2x2x1
jax: 0.10.0
libtpu: 0.0.40
codegen_flags: <defaults>
</compile_context>

<pallas_src>
import functools
import math

import jax
import jax.numpy as jnp
from jax.experimental import pallas as pl
from jax.experimental.pallas import tpu as pltpu


def _round_up(v, m):
    return (v + m - 1) // m * m


# ----------------------------------------------------------------------------
# Fused Pallas kernel: whole forward on one [C, tn] node tile
# ----------------------------------------------------------------------------
def _fused_gate_vae_kernel(xT_ref, vec_ref, w_ref, out_ref, *,
                           emb0_meta, res_metas, fc_metas, ro_meta,
                           hidden, npg, apply_pe, tn):
    """All node-feature tensors are kept TRANSPOSED [channels, nodes_tile] so
    the (large) node axis sits on the 128-lane axis.

    vec_ref : [V, 1]       packed column vectors (BN scale, BN shift, biases)
    w_ref   : [W, max_in]  packed row-stacked weight matrices
    metas   : static (cin, cout, scale_off, shift_off, bias_off, w_row_off)
    """

    def bn_relu_lin(h, meta):
        cin, cout, s_off, sh_off, b_off, wo = meta
        scale = vec_ref[s_off:s_off + cin, :]            # [cin, 1]
        shift = vec_ref[sh_off:sh_off + cin, :]          # [cin, 1]
        w = w_ref[wo:wo + cout, :cin]                    # [cout, cin]
        b = vec_ref[b_off:b_off + cout, :]               # [cout, 1]
        a = jnp.maximum(h * scale + shift, 0.0)          # BN(eval)+ReLU (VPU)
        return jnp.dot(w, a, preferred_element_type=jnp.float32) + b   # MXU

    # nan -> 0 cleaning folded into the first load (one vselect on the VPU).
    x = xT_ref[...]
    x = jnp.where(jnp.isnan(x), 0.0, x)

    # embedding[0]
    x = bn_relu_lin(x, emb0_meta)

    # embedding[1:] (residual uses pre-BN x, as in the torch module)
    for meta in res_metas:
        x = x + bn_relu_lin(x, meta)

    # Sinusoidal positional encoding, generated in-kernel (EUP):
    #   pe[c, j] = sin(pos_j * 10000^{-2*(c//2)/H} + (c % 2) * pi/2)
    # (cos == sin(.+pi/2): one transcendental per element, zero HBM traffic).
    if apply_pe:
        col = jax.lax.broadcasted_iota(jnp.int32, (hidden, 1), 0)
        odd = col & 1                                            # parity
        two_k = (col - odd).astype(jnp.float32)                  # 2*(c//2)
        inv_freq = jnp.exp(two_k * (-math.log(10000.0) / hidden))  # [H, 1]
        phase = odd.astype(jnp.float32) * (math.pi / 2.0)          # [H, 1]
        node = (jax.lax.broadcasted_iota(jnp.int32, (1, tn), 1)
                .astype(jnp.float32)
                + (pl.program_id(0) * tn).astype(jnp.float32))     # [1, tn]
        # node index modulo nodes_per_graph (float path, exact for N < 2^24)
        pos = node - jnp.floor(node / float(npg)) * float(npg)
        x = x + jnp.sin(pos * inv_freq + phase)

    # TODO(synk): self.gconv — Deep_GATE_Conv message-passing stack (class
    # definition not provided in the source); node features pass through.

    # lin: num_fc x (BN -> ReLU -> Dropout(id) -> Linear)
    for meta in fc_metas:
        x = bn_relu_lin(x, meta)

    # fused variational readout: [mu; logstd] -> one matmul, one output DMA.
    cin, cout, b_off, wo = ro_meta
    w = w_ref[wo:wo + cout, :cin]
    b = vec_ref[b_off:b_off + cout, :]
    out_ref[...] = (jnp.dot(w, x, preferred_element_type=jnp.float32)
                    + b).astype(out_ref.dtype)


# ----------------------------------------------------------------------------
# Host-side parameter packing: 2 slabs + static offsets (8-aligned rows)
# ----------------------------------------------------------------------------
def _pack_params(params):
    def ru8(v):
        return _round_up(v, 8)

    layer_list = [("emb0", params["emb0"])]
    layer_list += [("res", p) for p in params["emb_res"]]
    layer_list += [("fc", p) for p in params["fc"]]

    mu_w, mu_b = params["mu"]
    ls_w, ls_b = params["logstd"]
    ro_w = jnp.concatenate([mu_w, ls_w], axis=0)       # [2*outc, fc_channels]
    ro_b = jnp.concatenate([mu_b, ls_b], axis=0)       # [2*outc, 1]

    max_in = max([w.shape[1] for _, (_, _, w, _) in layer_list]
                 + [ro_w.shape[1]])

    vec_parts, w_parts = [], []
    vec_off, w_off = 0, 0

    def add_vec(a):
        nonlocal vec_off
        off = vec_off
        r8 = ru8(a.shape[0])
        vec_parts.append(jnp.pad(a, ((0, r8 - a.shape[0]), (0, 0))))
        vec_off += r8
        return off

    def add_w(a):
        nonlocal w_off
        off = w_off
        r8 = ru8(a.shape[0])
        w_parts.append(jnp.pad(a, ((0, r8 - a.shape[0]),
                                   (0, max_in - a.shape[1]))))
        w_off += r8
        return off

    metas = []
    for kind, (scale, shift, w, b) in layer_list:
        cout, cin = w.shape
        meta = (cin, cout, add_vec(scale), add_vec(shift), add_vec(b),
                add_w(w))
        metas.append((kind, meta))

    ro_meta = (ro_w.shape[1], ro_w.shape[0], add_vec(ro_b), add_w(ro_w))

    vec_slab = jnp.concatenate(vec_parts, axis=0)      # [V, 1]
    w_slab = jnp.concatenate(w_parts, axis=0)          # [W, max_in]

    emb0_meta = metas[0][1]
    res_metas = tuple(m for k, m in metas if k == "res")
    fc_metas = tuple(m for k, m in metas if k == "fc")
    return vec_slab, w_slab, emb0_meta, res_metas, fc_metas, ro_meta


# ----------------------------------------------------------------------------
# Forward wrapper
# ----------------------------------------------------------------------------
@functools.partial(
    jax.jit,
    static_argnames=("nodes_per_graph", "hidden_channels",
                     "propagate_messages", "positional_encoding", "tile_n"))
def gate_variational_encoder_forward(x, edge_index, edge_attr, batch_vec,
                                     params, *, nodes_per_graph,
                                     hidden_channels, propagate_messages=True,
                                     positional_encoding=True, tile_n=4096):
    """Returns (mu, logstd), each [N, outchannels]."""
    # batch.edge_attr[isnan] = 0 — its only consumer is the gconv stack,
    # which is a passthrough TODO here, so this is dead code for now.
    edge_attr = jnp.where(jnp.isnan(edge_attr), 0.0, edge_attr)
    # TODO(synk): dropout_adj (p=edge_dropout) — identity in eval mode.
    # TODO(synk): Deep_GATE_Conv message passing over edge_index / edge_attr.
    del edge_index, edge_attr, batch_vec

    n, cin = x.shape

    # Node-axis tiling: always lane-dense (multiple of 128); at least 2 grid
    # steps when possible so v7x megacore can shard the "parallel" axis.
    n128 = _round_up(n, 128)
    if n128 <= 128:
        tn = 128
    else:
        tn = min(_round_up(tile_n, 256), _round_up(n128 // 2, 128))
    n_pad = _round_up(n128, tn)
    grid = (n_pad // tn,)

    # Pad then transpose to [C, N_pad]: one fused XLA copy under jit.
    xT = jnp.pad(x, ((0, n_pad - n), (0, 0))).T

    (vec_slab, w_slab, emb0_meta, res_metas, fc_metas,
     ro_meta) = _pack_params(params)
    ro_cout = ro_meta[1]
    outc = ro_cout // 2

    kernel = functools.partial(
        _fused_gate_vae_kernel,
        emb0_meta=emb0_meta, res_metas=res_metas, fc_metas=fc_metas,
        ro_meta=ro_meta, hidden=hidden_channels, npg=nodes_per_graph,
        apply_pe=(positional_encoding and propagate_messages), tn=tn)

    # Advisory cost hint for XLA's scheduler.
    all_mm = [emb0_meta] + list(res_metas) + list(fc_metas)
    flops = 2 * n_pad * (sum(m[0] * m[1] for m in all_mm)
                         + ro_meta[0] * ro_meta[1])
    bytes_accessed = 4 * (cin * n_pad + vec_slab.size + w_slab.size
                          + ro_cout * n_pad)

    out = pl.pallas_call(
        kernel,
        out_shape=jax.ShapeDtypeStruct((ro_cout, n_pad), jnp.float32),
        grid=grid,
        in_specs=[pl.BlockSpec((cin, tn), lambda i: (0, i)),
                  pl.BlockSpec(vec_slab.shape, lambda i: (0, 0)),
                  pl.BlockSpec(w_slab.shape, lambda i: (0, 0))],
        out_specs=pl.BlockSpec((ro_cout, tn), lambda i: (0, i)),
        compiler_params=pltpu.CompilerParams(
            dimension_semantics=("parallel",)),
        cost_estimate=pl.CostEstimate(
            flops=int(flops),
            transcendentals=int(hidden_channels * n_pad),
            bytes_accessed=int(bytes_accessed)),
    )(xT, vec_slab, w_slab)

    mu = out[:outc, :n].T
    logstd = out[outc:, :n].T
    return mu, logstd


# ----------------------------------------------------------------------------
# Deterministic parameter initialisation (shapes from the torch module)
# ----------------------------------------------------------------------------
def init_linear(key, fan_in, fan_out):
    """torch.nn.Linear-style init; weight stored [out, in], bias [out, 1]."""
    k1, k2 = jax.random.split(key)
    bound = 1.0 / float(fan_in) ** 0.5
    w = jax.random.uniform(k1, (fan_out, fan_in), jnp.float32, -bound, bound)
    b = jax.random.uniform(k2, (fan_out, 1), jnp.float32, -bound, bound)
    return w, b


def init_bn(c, eps=1e-5):
    """BatchNorm1d eval affine (fresh running stats), stored as columns."""
    gamma = jnp.ones((c, 1), jnp.float32)
    beta = jnp.zeros((c, 1), jnp.float32)
    running_mean = jnp.zeros((c, 1), jnp.float32)
    running_var = jnp.ones((c, 1), jnp.float32)
    scale = gamma / jnp.sqrt(running_var + eps)
    shift = beta - running_mean * scale
    return scale, shift


# ----------------------------------------------------------------------------
if __name__ == "__main__":
    # GATE_variational_encoder defaults
    hidden_channels = 20
    inchannels = 15
    edgechannels = 1
    embedding_layers = 2
    num_fc = 1
    fc_channels = 15
    outchannels = 2

    # small synthetic graph batch: 2 graphs x 32 nodes
    num_graphs = 2
    nodes_per_graph = 32
    N = num_graphs * nodes_per_graph
    E = 128

    key = jax.random.PRNGKey(0)
    k_x, k_ei, k_ea, k_p = jax.random.split(key, 4)

    x = jax.random.normal(k_x, (N, inchannels), jnp.float32)
    x = x.at[0, 0].set(jnp.nan)                      # exercise nan-clean path
    edge_index = jax.random.randint(k_ei, (2, E), 0, N, jnp.int32)
    edge_attr = jax.random.normal(k_ea, (E, edgechannels), jnp.float32)
    edge_attr = edge_attr.at[3, 0].set(jnp.nan)
    batch_vec = jnp.repeat(jnp.arange(num_graphs, dtype=jnp.int32),
                           nodes_per_graph)

    # parameters
    n_layers = embedding_layers + num_fc
    keys = jax.random.split(k_p, n_layers + 2)
    params = {}
    w, b = init_linear(keys[0], inchannels, hidden_channels)
    params["emb0"] = (*init_bn(inchannels), w, b)

    params["emb_res"] = []
    for i in range(embedding_layers - 1):
        w, b = init_linear(keys[1 + i], hidden_channels, hidden_channels)
        params["emb_res"].append((*init_bn(hidden_channels), w, b))

    fc_dims = [hidden_channels] + [fc_channels] * num_fc
    params["fc"] = []
    for i in range(num_fc):
        w, b = init_linear(keys[embedding_layers + i],
                           fc_dims[i], fc_dims[i + 1])
        params["fc"].append((*init_bn(fc_dims[i]), w, b))

    params["mu"] = init_linear(keys[n_layers], fc_channels, outchannels)
    params["logstd"] = init_linear(keys[n_layers + 1], fc_channels, outchannels)

    mu, logstd = gate_variational_encoder_forward(
        x, edge_index, edge_attr, batch_vec, params,
        nodes_per_graph=nodes_per_graph, hidden_channels=hidden_channels,
        propagate_messages=True)
    mu, logstd = jax.block_until_ready((mu, logstd))

    assert mu.shape == (N, outchannels), mu.shape
    assert logstd.shape == (N, outchannels), logstd.shape
    assert not bool(jnp.any(jnp.isnan(mu)))
    assert not bool(jnp.any(jnp.isnan(logstd)))
    print("KERNEL_OK")
</pallas_src>

<mosaic_0001>
module attributes {stable_mosaic.version = 11 : i64} {
  func.func @_fused_gate_vae_kernel(%arg0: i32, %arg1: memref<15x128xf32, #tpu.memory_space<vmem>>, %arg2: memref<200x1xf32, #tpu.memory_space<vmem>>, %arg3: memref<72x20xf32, #tpu.memory_space<vmem>>, %arg4: memref<4x128xf32, #tpu.memory_space<vmem>>) attributes {dimension_semantics = [#tpu.dimension_semantics<parallel>], iteration_bounds = array<i64: 1>, scalar_prefetch = 0 : i64, scratch_operands = 0 : i64, tpu.core_type = #tpu.core_type<tc>, window_params = [{transform_indices = @transform_0, window_bounds = array<i64: 15, 128>}, {pipeline_mode = #tpu.pipeline_mode<synchronous>, transform_indices = @transform_1, window_bounds = array<i64: 200, 1>}, {pipeline_mode = #tpu.pipeline_mode<synchronous>, transform_indices = @transform_2, window_bounds = array<i64: 72, 20>}, {transform_indices = @transform_3, window_bounds = array<i64: 4, 128>}]} {
    %c0 = arith.constant 0 : index
    %c0_0 = arith.constant 0 : index
    %0 = vector.load %arg1[%c0, %c0_0] : memref<15x128xf32, #tpu.memory_space<vmem>>, vector<15x128xf32>
    %1 = arith.cmpf one, %0, %0 : vector<15x128xf32>
    %cst = arith.constant 0.000000e+00 : f32
    %2 = vector.broadcast %cst : f32 to vector<15x128xf32>
    %3 = arith.select %1, %2, %0 : vector<15x128xi1>, vector<15x128xf32>
    %c0_1 = arith.constant 0 : index
    %c0_2 = arith.constant 0 : index
    %4 = vector.load %arg2[%c0_1, %c0_2] : memref<200x1xf32, #tpu.memory_space<vmem>>, vector<15x1xf32>
    %c16 = arith.constant 16 : index
    %c0_3 = arith.constant 0 : index
    %5 = vector.load %arg2[%c16, %c0_3] : memref<200x1xf32, #tpu.memory_space<vmem>>, vector<15x1xf32>
    %c0_4 = arith.constant 0 : index
    %c0_5 = arith.constant 0 : index
    %6 = vector.load %arg3[%c0_4, %c0_5] : memref<72x20xf32, #tpu.memory_space<vmem>>, vector<20x15xf32>
    %c32 = arith.constant 32 : index
    %c0_6 = arith.constant 0 : index
    %7 = vector.load %arg2[%c32, %c0_6] : memref<200x1xf32, #tpu.memory_space<vmem>>, vector<20x1xf32>
    %8 = vector.broadcast %4 : vector<15x1xf32> to vector<15x128xf32>
    %9 = arith.mulf %3, %8 : vector<15x128xf32>
    %10 = vector.broadcast %5 : vector<15x1xf32> to vector<15x128xf32>
    %11 = arith.addf %9, %10 : vector<15x128xf32>
    %cst_7 = arith.constant 0.000000e+00 : f32
    %12 = vector.broadcast %cst_7 : f32 to vector<15x128xf32>
    %13 = arith.maximumf %11, %12 : vector<15x128xf32>
    %cst_8 = arith.constant dense<0.000000e+00> : vector<20x128xf32>
    %14 = tpu.matmul %6, %13, %cst_8 {dimension_numbers = #tpu.dot_dimension_numbers<[1], [0], [0], [1], [0, 0, 1, 1], [], []>} : vector<20x15xf32>, vector<15x128xf32>, vector<20x128xf32> -> vector<20x128xf32>
    %15 = vector.broadcast %7 : vector<20x1xf32> to vector<20x128xf32>
    %16 = arith.addf %14, %15 : vector<20x128xf32>
    %c56 = arith.constant 56 : index
    %c0_9 = arith.constant 0 : index
    %17 = vector.load %arg2[%c56, %c0_9] : memref<200x1xf32, #tpu.memory_space<vmem>>, vector<20x1xf32>
    %c80 = arith.constant 80 : index
    %c0_10 = arith.constant 0 : index
    %18 = vector.load %arg2[%c80, %c0_10] : memref<200x1xf32, #tpu.memory_space<vmem>>, vector<20x1xf32>
    %c24 = arith.constant 24 : index
    %c0_11 = arith.constant 0 : index
    %19 = vector.load %arg3[%c24, %c0_11] : memref<72x20xf32, #tpu.memory_space<vmem>>, vector<20x20xf32>
    %c104 = arith.constant 104 : index
    %c0_12 = arith.constant 0 : index
    %20 = vector.load %arg2[%c104, %c0_12] : memref<200x1xf32, #tpu.memory_space<vmem>>, vector<20x1xf32>
    %21 = vector.broadcast %17 : vector<20x1xf32> to vector<20x128xf32>
    %22 = arith.mulf %16, %21 : vector<20x128xf32>
    %23 = vector.broadcast %18 : vector<20x1xf32> to vector<20x128xf32>
    %24 = arith.addf %22, %23 : vector<20x128xf32>
    %cst_13 = arith.constant 0.000000e+00 : f32
    %25 = vector.broadcast %cst_13 : f32 to vector<20x128xf32>
    %26 = arith.maximumf %24, %25 : vector<20x128xf32>
    %cst_14 = arith.constant dense<0.000000e+00> : vector<20x128xf32>
    %27 = tpu.matmul %19, %26, %cst_14 {dimension_numbers = #tpu.dot_dimension_numbers<[1], [0], [0], [1], [0, 0, 1, 1], [], []>} : vector<20x20xf32>, vector<20x128xf32>, vector<20x128xf32> -> vector<20x128xf32>
    %28 = vector.broadcast %20 : vector<20x1xf32> to vector<20x128xf32>
    %29 = arith.addf %27, %28 : vector<20x128xf32>
    %30 = arith.addf %16, %29 : vector<20x128xf32>
    %31 = tpu.iota {dimensions = array<i32: 0>} : vector<20x1xi32>
    %c1_i32 = arith.constant 1 : i32
    %32 = vector.broadcast %c1_i32 : i32 to vector<20x1xi32>
    %33 = arith.andi %31, %32 : vector<20x1xi32>
    %34 = arith.subi %31, %33 : vector<20x1xi32>
    %35 = arith.sitofp %34 : vector<20x1xi32> to vector<20x1xf32>
    %cst_15 = arith.constant -0.460517019 : f32
    %36 = vector.broadcast %cst_15 : f32 to vector<20x1xf32>
    %37 = arith.mulf %35, %36 : vector<20x1xf32>
    %38 = math.exp %37 : vector<20x1xf32>
    %39 = arith.sitofp %33 : vector<20x1xi32> to vector<20x1xf32>
    %cst_16 = arith.constant 1.57079637 : f32
    %40 = vector.broadcast %cst_16 : f32 to vector<20x1xf32>
    %41 = arith.mulf %39, %40 : vector<20x1xf32>
    %42 = tpu.iota {dimensions = array<i32: 1>} : vector<1x128xi32>
    %43 = arith.sitofp %42 : vector<1x128xi32> to vector<1x128xf32>
    %c128_i32 = arith.constant 128 : i32
    %44 = arith.muli %arg0, %c128_i32 : i32
    %45 = arith.sitofp %44 : i32 to f32
    %46 = vector.broadcast %45 : f32 to vector<1x128xf32>
    %47 = arith.addf %43, %46 : vector<1x128xf32>
    %cst_17 = arith.constant 3.200000e+01 : f32
    %48 = vector.broadcast %cst_17 : f32 to vector<1x128xf32>
    %49 = arith.divf %47, %48 : vector<1x128xf32>
    %50 = math.floor %49 : vector<1x128xf32>
    %cst_18 = arith.constant 3.200000e+01 : f32
    %51 = vector.broadcast %cst_18 : f32 to vector<1x128xf32>
    %52 = arith.mulf %50, %51 : vector<1x128xf32>
    %53 = arith.subf %47, %52 : vector<1x128xf32>
    %54 = vector.broadcast %53 : vector<1x128xf32> to vector<20x128xf32>
    %55 = vector.broadcast %38 : vector<20x1xf32> to vector<20x128xf32>
    %56 = arith.mulf %54, %55 : vector<20x128xf32>
    %57 = vector.broadcast %41 : vector<20x1xf32> to vector<20x128xf32>
    %58 = arith.addf %56, %57 : vector<20x128xf32>
    %59 = math.sin %58 : vector<20x128xf32>
    %60 = arith.addf %30, %59 : vector<20x128xf32>
    %c128 = arith.constant 128 : index
    %c0_19 = arith.constant 0 : index
    %61 = vector.load %arg2[%c128, %c0_19] : memref<200x1xf32, #tpu.memory_space<vmem>>, vector<20x1xf32>
    %c152 = arith.constant 152 : index
    %c0_20 = arith.constant 0 : index
    %62 = vector.load %arg2[%c152, %c0_20] : memref<200x1xf32, #tpu.memory_space<vmem>>, vector<20x1xf32>
    %c48 = arith.constant 48 : index
    %c0_21 = arith.constant 0 : index
    %63 = vector.load %arg3[%c48, %c0_21] : memref<72x20xf32, #tpu.memory_space<vmem>>, vector<15x20xf32>
    %c176 = arith.constant 176 : index
    %c0_22 = arith.constant 0 : index
    %64 = vector.load %arg2[%c176, %c0_22] : memref<200x1xf32, #tpu.memory_space<vmem>>, vector<15x1xf32>
    %65 = vector.broadcast %61 : vector<20x1xf32> to vector<20x128xf32>
    %66 = arith.mulf %60, %65 : vector<20x128xf32>
    %67 = vector.broadcast %62 : vector<20x1xf32> to vector<20x128xf32>
    %68 = arith.addf %66, %67 : vector<20x128xf32>
    %cst_23 = arith.constant 0.000000e+00 : f32
    %69 = vector.broadcast %cst_23 : f32 to vector<20x128xf32>
    %70 = arith.maximumf %68, %69 : vector<20x128xf32>
    %cst_24 = arith.constant dense<0.000000e+00> : vector<15x128xf32>
    %71 = tpu.matmul %63, %70, %cst_24 {dimension_numbers = #tpu.dot_dimension_numbers<[1], [0], [0], [1], [0, 0, 1, 1], [], []>} : vector<15x20xf32>, vector<20x128xf32>, vector<15x128xf32> -> vector<15x128xf32>
    %72 = vector.broadcast %64 : vector<15x1xf32> to vector<15x128xf32>
    %73 = arith.addf %71, %72 : vector<15x128xf32>
    %c64 = arith.constant 64 : index
    %c0_25 = arith.constant 0 : index
    %74 = vector.load %arg3[%c64, %c0_25] : memref<72x20xf32, #tpu.memory_space<vmem>>, vector<4x15xf32>
    %c192 = arith.constant 192 : index
    %c0_26 = arith.constant 0 : index
    %75 = vector.load %arg2[%c192, %c0_26] : memref<200x1xf32, #tpu.memory_space<vmem>>, vector<4x1xf32>
    %cst_27 = arith.constant dense<0.000000e+00> : vector<4x128xf32>
    %76 = tpu.matmul %74, %73, %cst_27 {dimension_numbers = #tpu.dot_dimension_numbers<[1], [0], [0], [1], [0, 0, 1, 1], [], []>} : vector<4x15xf32>, vector<15x128xf32>, vector<4x128xf32> -> vector<4x128xf32>
    %77 = vector.broadcast %75 : vector<4x1xf32> to vector<4x128xf32>
    %78 = arith.addf %76, %77 : vector<4x128xf32>
    %c0_28 = arith.constant 0 : index
    %c0_29 = arith.constant 0 : index
    %79 = vector.load %arg4[%c0_28, %c0_29] : memref<4x128xf32, #tpu.memory_space<vmem>>, vector<4x128xf32>
    tpu.vector_store %arg4[%c0_28, %c0_29], %78 {strides = array<i32>} : memref<4x128xf32, #tpu.memory_space<vmem>>, vector<4x128xf32>,
    return
  }
  func.func @transform_0(%arg0: i32) -> (i32, i32) {
    %c0_i32 = arith.constant 0 : i32
    %c0_i32_0 = arith.constant 0 : i32
    return %c0_i32, %arg0 : i32, i32
  }
  func.func @transform_1(%arg0: i32) -> (i32, i32) {
    %c0_i32 = arith.constant 0 : i32
    %c0_i32_0 = arith.constant 0 : i32
    %c0_i32_1 = arith.constant 0 : i32
    return %c0_i32, %c0_i32_0 : i32, i32
  }
  func.func @transform_2(%arg0: i32) -> (i32, i32) {
    %c0_i32 = arith.constant 0 : i32
    %c0_i32_0 = arith.constant 0 : i32
    %c0_i32_1 = arith.constant 0 : i32
    return %c0_i32, %c0_i32_0 : i32, i32
  }
  func.func @transform_3(%arg0: i32) -> (i32, i32) {
    %c0_i32 = arith.constant 0 : i32
    %c0_i32_0 = arith.constant 0 : i32
    return %c0_i32, %arg0 : i32, i32
  }
}

</mosaic_0001>

<llo_original>
// kernel: gate_variational_encoder_forward.1
$region0: #{gate_variational_encoder_forward.1}
  #allocation0 [shape = 'u32[]', space=smem, size = 0x4, offset = 0x4, fixed_abs, tag = 'smem constant byte address 0x4 - core index']
  #allocation1 [shape = 'u32[144,128]{1,0:T(1,128)}', space=vmem, size = 0x12000, scoped, tag = 'internal scratch']
  %s0 = inlined_call_operand.vmem [shape: f32[15,128], index: 0, kind: input, shape index: {}]
  %s1 = inlined_call_operand.vmem [shape: f32[200,1], index: 1, kind: input, shape index: {}]
  %s2 = inlined_call_operand.vmem [shape: f32[72,20], index: 2, kind: input, shape index: {}]
  %s3 = inlined_call_operand.vmem [shape: f32[4,128], index: 3, kind: output, shape index: {}]
  %s4 = sld [smem:[#allocation0]]
  $region22: #{gate_variational_encoder_forward.1} parent=0
    _
  %s6 = ssub.s32 1, %s4
  %s7 = scalar_select 0, %s6, %s4
  // Predicated region
  $region2: #{gate_variational_encoder_forward.1} parent=0 // pred_check
    _
  $region3: #{gate_variational_encoder_forward.1} parent=0 // pred_check_branch
    %9 = sbr.rel (0) target = $region5
  $region4: #{gate_variational_encoder_forward.1} parent=0 // pred_region
    _
  $region5: #{gate_variational_encoder_forward.1} parent=0 // pred_fallthru
    _
  // Predicated region
  $region6: #{gate_variational_encoder_forward.1} parent=0 // pred_check
    _
  $region7: #{gate_variational_encoder_forward.1} parent=0 // pred_check_branch
    %11 = sbr.rel (0) target = $region9
  $region8: #{gate_variational_encoder_forward.1} parent=0 // pred_region
    _
  $region9: #{gate_variational_encoder_forward.1} parent=0 // pred_fallthru
    _
  // Predicated region
  $region10: #{gate_variational_encoder_forward.1} parent=0 // pred_check
    _
  $region11: #{gate_variational_encoder_forward.1} parent=0 // pred_check_branch
    %13 = sbr.rel (0) target = $region13
  $region12: #{gate_variational_encoder_forward.1} parent=0 // pred_region
    _
  $region13: #{gate_variational_encoder_forward.1} parent=0 // pred_fallthru
    _
  %v14 = vld [vmem:[%s0] sm:$0xff]
  %v15 = vld [vmem:[%s0 + $0x8] sm:$0x7f]
  %vm16 = vcmp.ne.f32.partialorder %v14, %v14
  %vm17 = vcmp.ne.f32.partialorder %v15, %v15
  %v18 = vsel %vm16, 0.0, %v14
  %v19 = vsel %vm17, 0.0, %v15
  %v20 = vld [vmem:[%s1] sm:$0xff]
  %v21 = vld [vmem:[%s1 + $0x8] sm:$0x7f]
  %v22 = vld [vmem:[%s1 + $0x10] sm:$0xff]
  %v23 = vld [vmem:[%s1 + $0x18] sm:$0x7f]
  %v24 = vld [vmem:[%s2] sm:$0xff]
  %v25 = vld [vmem:[%s2 + $0x8] sm:$0xff]
  %v26 = vld [vmem:[%s2 + $0x10] sm:$0xf]
  %v27 = vld [vmem:[%s1 + $0x20] sm:$0xff]
  %v28 = vld [vmem:[%s1 + $0x28] sm:$0xff]
  %v29 = vld [vmem:[%s1 + $0x30] sm:$0xf]
  %31 = vset.pattern.permute.xlu0 0
  %32 = vperm.xlu0 %31, %v20
  %v33 = vpop.permute.xlu0 %32
  %36 = vset.pattern.permute.xlu0 0
  %37 = vperm.xlu0 %36, %v21
  %v38 = vpop.permute.xlu0 %37
  %v40 = vmul.f32 %v18, %v33
  %v41 = vmul.f32 %v19, %v38
  %43 = vset.pattern.permute.xlu0 0
  %44 = vperm.xlu0 %43, %v22
  %v45 = vpop.permute.xlu0 %44
  %48 = vset.pattern.permute.xlu0 0
  %49 = vperm.xlu0 %48, %v23
  %v50 = vpop.permute.xlu0 %49
  %v52 = vadd.f32 %v40, %v45
  %v53 = vadd.f32 %v41, %v50
  %v54 = vmax.f32 %v52, 0.0
  %v55 = vmax.f32 %v53, 0.0
  %57 = vset.pattern.permute.xlu0 0
  %58 = vperm.xlu0 %57, %v27
  %v59 = vpop.permute.xlu0 %58
  %62 = vset.pattern.permute.xlu0 0
  %63 = vperm.xlu0 %62, %v28
  %v64 = vpop.permute.xlu0 %63
  %67 = vset.pattern.permute.xlu0 0
  %68 = vperm.xlu0 %67, %v29
  %v69 = vpop.permute.xlu0 %68
  %vm71 = vcmask 121856
  %v73 = vsel %vm71, %v24, 0
  %v76 = vsel %vm71, %v25, 0
  %v79 = vsel %vm71, %v26, 0
  %vm81 = vcmask 1046528
  %v83 = vsel %vm81, %v55, 0
  %85 = vmatprep.subr.mxu0 0.0
  %86 = vmatpush1.msra.mxu0 0.0
  %87 = vmatprep.subr.mxu0 0.0
  %88 = vmatpush1.msra.mxu0 0.0
  %89 = vmatprep.subr.mxu0 0.0
  %90 = vmatpush1.msra.mxu0 0.0
  %91 = vmatprep.subr.mxu0 0.0
  %92 = vmatpush1.msra.mxu0 0.0
  %93 = vmatprep.subr.mxu0 0.0
  %94 = vmatpush1.msra.mxu0 0.0
  %95 = vmatprep.subr.mxu0 0.0
  %96 = vmatpush1.msra.mxu0 0.0
  %97 = vmatprep.subr.mxu0 0.0
  %98 = vmatpush1.msra.mxu0 0.0
  %99 = vmatprep.subr.mxu0 0.0
  %100 = vmatpush1.msra.mxu0 0.0
  %101 = vmatprep.subr.mxu0 0.0
  %102 = vmatpush1.msra.mxu0 0.0
  %103 = vmatprep.subr.mxu0 0.0
  %104 = vmatpush1.msra.mxu0 0.0
  %105 = vmatprep.subr.mxu0 0.0
  %106 = vmatpush1.msra.mxu0 0.0
  %107 = vmatprep.subr.mxu0 0.0
  %108 = vmatpush1.msra.mxu0 0.0
  %109 = vmatprep.subr.mxu0 0.0
  %110 = vmatpush1.msra.mxu0 0.0
  %111 = vmatprep.subr.mxu0 0.0
  %112 = vmatpush1.msra.mxu0 0.0
  %113 = vmatprep.subr.mxu0 0.0
  %114 = vmatpush1.msra.mxu0 %v83
  %115 = vmatprep.subr.mxu0 0.0
  %116 = vmatpush1.msra.mxu0 %v54
  %117 = vmatprep.subr.mxu0 0.0
  %118 = vmatpush2.msra.mxu0 0.0
  %119 = vmatprep.subr.mxu0 0.0
  %120 = vmatpush2.msra.mxu0 0.0
  %121 = vmatprep.subr.mxu0 0.0
  %122 = vmatpush2.msra.mxu0 0.0
  %123 = vmatprep.subr.mxu0 0.0
  %124 = vmatpush2.msra.mxu0 0.0
  %125 = vmatprep.subr.mxu0 0.0
  %126 = vmatpush2.msra.mxu0 0.0
  %127 = vmatprep.subr.mxu0 0.0
  %128 = vmatpush2.msra.mxu0 0.0
  %129 = vmatprep.subr.mxu0 0.0
  %130 = vmatpush2.msra.mxu0 0.0
  %131 = vmatprep.subr.mxu0 0.0
  %132 = vmatpush2.msra.mxu0 0.0
  %133 = vmatprep.subr.mxu0 0.0
  %134 = vmatpush2.msra.mxu0 0.0
  %135 = vmatprep.subr.mxu0 0.0
  %136 = vmatpush2.msra.mxu0 0.0
  %137 = vmatprep.subr.mxu0 0.0
  %138 = vmatpush2.msra.mxu0 0.0
  %139 = vmatprep.subr.mxu0 0.0
  %140 = vmatpush2.msra.mxu0 0.0
  %141 = vmatprep.subr.mxu0 0.0
  %142 = vmatpush2.msra.mxu0 0.0
  %143 = vmatprep.subr.mxu0 0.0
  %144 = vmatpush2.msra.mxu0 0.0
  %145 = vmatprep.subr.mxu0 0.0
  %146 = vmatpush2.msra.mxu0 0.0
  %147 = vmatprep.subr.mxu0 0.0
  %148 = vmatpush2.msra.mxu0 0.0
  %149 = vmatprep.mubr.f32.mxu0 0.0
  %150 = vmatmul.mubr.f32.gmra.mxu0 %v73
  %v151 = vpop.f32.mrf.mxu0
  %v152 = vadd.f32 %v59, %v151
  %v153 = vpop.f32.mrf.mxu0
  %154 = vmatprep.mubr.f32.mxu0 0.0
  %155 = vmatmul.mubr.f32.gmra.mxu0 %v76
  %v156 = vpop.f32.mrf.mxu0
  %v157 = vadd.f32 %v64, %v156
  %v158 = vpop.f32.mrf.mxu0
  %159 = vmatprep.mubr.f32.mxu0 0.0
  %160 = vmatmul.mubr.f32.gmra.mxu0 %v79
  %v161 = vpop.f32.mrf.mxu0
  %v162 = vadd.f32 %v69, %v161
  %v163 = vpop.f32.mrf.mxu0
  %164 = vdwg.mxu0
  %v165 = vld [vmem:[%s1 + $0x38] sm:$0xff]
  %v166 = vld [vmem:[%s1 + $0x40] sm:$0xff]
  %v167 = vld [vmem:[%s1 + $0x48] sm:$0xf]
  %v168 = vld [vmem:[%s1 + $0x50] sm:$0xff]
  %v169 = vld [vmem:[%s1 + $0x58] sm:$0xff]
  %v170 = vld [vmem:[%s1 + $0x60] sm:$0xf]
  %v171 = vld [vmem:[%s2 + $0x18] sm:$0xff]
  %v172 = vld [vmem:[%s2 + $0x20] sm:$0xff]
  %v173 = vld [vmem:[%s2 + $0x28] sm:$0xf]
  %v174 = vld [vmem:[%s1 + $0x68] sm:$0xff]
  %v175 = vld [vmem:[%s1 + $0x70] sm:$0xff]
  %v176 = vld [vmem:[%s1 + $0x78] sm:$0xf]
  %178 = vset.pattern.permute.xlu0 0
  %179 = vperm.xlu0 %178, %v165
  %v180 = vpop.permute.xlu0 %179
  %183 = vset.pattern.permute.xlu0 0
  %184 = vperm.xlu0 %183, %v166
  %v185 = vpop.permute.xlu0 %184
  %188 = vset.pattern.permute.xlu0 0
  %189 = vperm.xlu0 %188, %v167
  %v190 = vpop.permute.xlu0 %189
  %v192 = vmul.f32 %v152, %v180
  %v193 = vmul.f32 %v157, %v185
  %v194 = vmul.f32 %v162, %v190
  %196 = vset.pattern.permute.xlu0 0
  %197 = vperm.xlu0 %196, %v168
  %v198 = vpop.permute.xlu0 %197
  %201 = vset.pattern.permute.xlu0 0
  %202 = vperm.xlu0 %201, %v169
  %v203 = vpop.permute.xlu0 %202
  %206 = vset.pattern.permute.xlu0 0
  %207 = vperm.xlu0 %206, %v170
  %v208 = vpop.permute.xlu0 %207
  %v210 = vadd.f32 %v192, %v198
  %v211 = vadd.f32 %v193, %v203
  %v212 = vadd.f32 %v194, %v208
  %v213 = vmax.f32 %v210, 0.0
  %v214 = vmax.f32 %v211, 0.0
  %v215 = vmax.f32 %v212, 0.0
  %217 = vset.pattern.permute.xlu0 0
  %218 = vperm.xlu0 %217, %v174
  %v219 = vpop.permute.xlu0 %218
  %222 = vset.pattern.permute.xlu0 0
  %223 = vperm.xlu0 %222, %v175
  %v224 = vpop.permute.xlu0 %223
  %227 = vset.pattern.permute.xlu0 0
  %228 = vperm.xlu0 %227, %v176
  %v229 = vpop.permute.xlu0 %228
  %vm231 = vcmask 162816
  %v233 = vsel %vm231, %v171, 0
  %v236 = vsel %vm231, %v172, 0
  %v239 = vsel %vm231, %v173, 0
  %vm241 = vcmask 1043456
  %v243 = vsel %vm241, %v215, 0
  %245 = vmatprep.subr.mxu0 0.0
  %246 = vmatpush1.msra.mxu0 0.0
  %247 = vmatprep.subr.mxu0 0.0
  %248 = vmatpush1.msra.mxu0 0.0
  %249 = vmatprep.subr.mxu0 0.0
  %250 = vmatpush1.msra.mxu0 0.0
  %251 = vmatprep.subr.mxu0 0.0
  %252 = vmatpush1.msra.mxu0 0.0
  %253 = vmatprep.subr.mxu0 0.0
  %254 = vmatpush1.msra.mxu0 0.0
  %255 = vmatprep.subr.mxu0 0.0
  %256 = vmatpush1.msra.mxu0 0.0
  %257 = vmatprep.subr.mxu0 0.0
  %258 = vmatpush1.msra.mxu0 0.0
  %259 = vmatprep.subr.mxu0 0.0
  %260 = vmatpush1.msra.mxu0 0.0
  %261 = vmatprep.subr.mxu0 0.0
  %262 = vmatpush1.msra.mxu0 0.0
  %263 = vmatprep.subr.mxu0 0.0
  %264 = vmatpush1.msra.mxu0 0.0
  %265 = vmatprep.subr.mxu0 0.0
  %266 = vmatpush1.msra.mxu0 0.0
  %267 = vmatprep.subr.mxu0 0.0
  %268 = vmatpush1.msra.mxu0 0.0
  %269 = vmatprep.subr.mxu0 0.0
  %270 = vmatpush1.msra.mxu0 0.0
  %271 = vmatprep.subr.mxu0 0.0
  %272 = vmatpush1.msra.mxu0 %v243
  %273 = vmatprep.subr.mxu0 0.0
  %274 = vmatpush1.msra.mxu0 %v214
  %275 = vmatprep.subr.mxu0 0.0
  %276 = vmatpush1.msra.mxu0 %v213
  %277 = vmatprep.subr.mxu0 0.0
  %278 = vmatpush2.msra.mxu0 0.0
  %279 = vmatprep.subr.mxu0 0.0
  %280 = vmatpush2.msra.mxu0 0.0
  %281 = vmatprep.subr.mxu0 0.0
  %282 = vmatpush2.msra.mxu0 0.0
  %283 = vmatprep.subr.mxu0 0.0
  %284 = vmatpush2.msra.mxu0 0.0
  %285 = vmatprep.subr.mxu0 0.0
  %286 = vmatpush2.msra.mxu0 0.0
  %287 = vmatprep.subr.mxu0 0.0
  %288 = vmatpush2.msra.mxu0 0.0
  %289 = vmatprep.subr.mxu0 0.0
  %290 = vmatpush2.msra.mxu0 0.0
  %291 = vmatprep.subr.mxu0 0.0
  %292 = vmatpush2.msra.mxu0 0.0
  %293 = vmatprep.subr.mxu0 0.0
  %294 = vmatpush2.msra.mxu0 0.0
  %295 = vmatprep.subr.mxu0 0.0
  %296 = vmatpush2.msra.mxu0 0.0
  %297 = vmatprep.subr.mxu0 0.0
  %298 = vmatpush2.msra.mxu0 0.0
  %299 = vmatprep.subr.mxu0 0.0
  %300 = vmatpush2.msra.mxu0 0.0
  %301 = vmatprep.subr.mxu0 0.0
  %302 = vmatpush2.msra.mxu0 0.0
  %303 = vmatprep.subr.mxu0 0.0
  %304 = vmatpush2.msra.mxu0 0.0
  %305 = vmatprep.subr.mxu0 0.0
  %306 = vmatpush2.msra.mxu0 0.0
  %307 = vmatprep.subr.mxu0 0.0
  %308 = vmatpush2.msra.mxu0 0.0
  %309 = vmatprep.mubr.f32.mxu0 0.0
  %310 = vmatmul.mubr.f32.gmra.mxu0 %v233
  %v311 = vpop.f32.mrf.mxu0
  %v312 = vadd.f32 %v219, %v311
  %v313 = vpop.f32.mrf.mxu0
  %314 = vmatprep.mubr.f32.mxu0 0.0
  %315 = vmatmul.mubr.f32.gmra.mxu0 %v236
  %v316 = vpop.f32.mrf.mxu0
  %v317 = vadd.f32 %v224, %v316
  %v318 = vpop.f32.mrf.mxu0
  %319 = vmatprep.mubr.f32.mxu0 0.0
  %320 = vmatmul.mubr.f32.gmra.mxu0 %v239
  %v321 = vpop.f32.mrf.mxu0
  %v322 = vadd.f32 %v229, %v321
  %v323 = vpop.f32.mrf.mxu0
  %324 = vdwg.mxu0
  %v325 = vadd.f32 %v152, %v312
  %v326 = vadd.f32 %v157, %v317
  %v327 = vadd.f32 %v162, %v322
  %v328 = vlaneseq
  %v329 = vshrl.u32 %v328, 7
  %v330 = vadd.s32 %v329, 8
  %v331 = vadd.s32 %v329, 16
  %v332 = vand.u32 %v329, 1
  %v333 = vand.u32 %v330, 1
  %v334 = vand.u32 %v331, 1
  %v335 = vsub.s32 %v329, %v332
  %v336 = vsub.s32 %v330, %v333
  %v337 = vsub.s32 %v331, %v334
  %v338 = vcvt.s32.f32 %v335
  %v339 = vcvt.s32.f32 %v336
  %v340 = vcvt.s32.f32 %v337
  %v341 = vmul.f32 %v338, -0.46051702
  %v342 = vmul.f32 %v339, -0.46051702
  %v343 = vmul.f32 %v340, -0.46051702
  %v344 = vmul.f32 %v341, 1.442695
  %v345 = vpow.pop %v344
  %v346 = vmul.f32 %v342, 1.442695
  %v347 = vpow.pop %v346
  %v348 = vmul.f32 %v343, 1.442695
  %v349 = vpow.pop %v348
  %v350 = vcvt.s32.f32 %v332
  %v351 = vcvt.s32.f32 %v333
  %v352 = vcvt.s32.f32 %v334
  %v353 = vmul.f32 %v350, 1.5707964
  %v354 = vmul.f32 %v351, 1.5707964
  %v355 = vmul.f32 %v352, 1.5707964
  %v356 = vlaneseq
  %v357 = vand.u32 %v356, 127
  %v358 = vcvt.s32.f32 %v357
  %s359 = smul.u32 0, 128
  %s360 = scvt.s32.f32 %s359
  %v361 = vstv %s360
  %v362 = vadd.f32 %v358, %v361
  %v363 = vrcp.pop 32.0
  %v364 = vmul.f32 %v362, %v363
  %v365 = vfloor.f32 %v364
  %v366 = vmul.f32 %v365, 32.0
  %v367 = vsub.f32 %v362, %v366
  %v368 = vmul.f32 %v367, %v345
  %v369 = vmul.f32 %v367, %v347
  %v370 = vmul.f32 %v367, %v349
  %v371 = vadd.f32 %v368, %v353
  %v372 = vadd.f32 %v369, %v354
  %v373 = vadd.f32 %v370, %v355
  %v374 = vand.u32 2147483647, %v371
  %vm375 = vcmp.le.f32.partialorder %v374, 0.7853982
  %vm376 = vcmp.lt.s32.totalorder %v371, 0
  %v377 = vand.u32 %v371, 2139095040
  %v378 = vshrl.u32 %v377, 23
  %v379 = vsub.s32 %v378, 127
  %v380 = vand.u32 2147483647, %v371
  %v381 = vand.u32 %v380, 8388607
  %v382 = vor.u32 %v381, 8388608
  %v383 = vsub.s32 0, %v382
  %v384 = vadd.s32 %v379, 1
  %vm385 = vcmp.gt.s32.totalorder %v384, 0
  %v386 = vsel %vm385, %v384, 0
  %v387 = vshrl.u32 %v386, 5
  %v388 = vand.u32 %v386, 31
  %v389 = vsub.s32 32, %v388
  %v390 = vshrl.u32 683565275, %v389
  %v391 = vshll.u32 683565275, %v388
  %v392 = vshrl.u32 2475754826, %v389
  %v393 = vor.u32 %v391, %v392
  %v394 = vshll.u32 2475754826, %v388
  %v395 = vshrl.u32 2131351028, %v389
  %v396 = vor.u32 %v394, %v395
  %v397 = vshll.u32 2131351028, %v388
  %v398 = vshrl.u32 2102212464, %v389
  %v399 = vor.u32 %v397, %v398
  %v400 = vshll.u32 2102212464, %v388
  %v401 = vshrl.u32 920167782, %v389
  %v402 = vor.u32 %v400, %v401
  %v403 = vshll.u32 920167782, %v388
  %v404 = vshrl.u32 1326507024, %v389
  %v405 = vor.u32 %v403, %v404
  %vm406 = vcmp.lt.s32.totalorder %v387, 1
  %vm407 = vcmp.lt.s32.totalorder %v387, 2
  %vm408 = vcmp.lt.s32.totalorder %v387, 3
  %vm409 = vcmp.lt.s32.totalorder %v387, 4
  %v410 = vsel %vm406, %v390, %v393
  %v411 = vsel %vm409, %v399, 2102212464
  %v412 = vsel %vm408, %v396, %v411
  %v413 = vsel %vm407, %v410, %v412
  %v414 = vsel %vm406, %v393, %v396
  %v415 = vsel %vm409, %v402, 920167782
  %v416 = vsel %vm408, %v399, %v415
  %v417 = vsel %vm407, %v414, %v416
  %v418 = vsel %vm406, %v396, %v399
  %v419 = vsel %vm409, %v405, 1326507024
  %v420 = vsel %vm408, %v402, %v419
  %v421 = vsel %vm407, %v418, %v420
  %v422 = vshll.u32 %v382, 8
  %v423 = vmul.u32.u64.compose %v422, %v421
  %v424 = vextract.low.u32 %v423
  %v425 = vextract.high.u32 %v423
  %v426 = vmul.u32.u64.compose %v422, %v417
  %v427 = vextract.low.u32 %v426
  %v428 = vextract.high.u32 %v426
  %v429 = vmul.u32 %v422, %v413
  %v430 = vadd.s32 %v425, %v427
  %vm431 = vc.u32 %v425, %v427
  %v432 = vadd.s32 %v428, 1
  %v433 = vsel %vm431, %v432, %v428
  %v434 = vadd.s32 %v429, %v433
  %v435 = vadd.s32 %v434, 536870912
  %v436 = vshrl.u32 %v435, 30
  %v437 = vshll.u32 %v436, 30
  %v438 = vsub.s32 %v434, %v437
  %vm439 = vcmp.lt.s32.totalorder %v438, 0
  %v440 = vsub.s32 0, %v438
  %v441 = vsel %vm439, %v440, %v438
  %v442 = vclz %v441
  %v443 = vsub.s32 %v442, 2
  %vm444 = vcmp.gt.s32.totalorder 0, %v443
  %v445 = vsel %vm444, 0, %v443
  %v446 = vsub.s32 32, %v445
  %v447 = vshll.u32 %v438, %v445
  %v448 = vshrl.u32 %v430, %v446
  %v449 = vor.u32 %v447, %v448
  %v450 = vsub.s32 4294967266, %v445
  %v451 = vadd.s32 %v450, 127
  %v452 = vshll.u32 %v451, 23
  %v453 = vor.u32 4788187, %v452
  %v454 = vand.u32 2147483647, %v453
  %v456 = vcvt.s32.f32 %v449
  %v457 = vmul.f32 %v456, %v454
  %v458 = vxor.u32 %v457, 2147483648
  %v459 = vsel %vm376, %v458, %v457
  %v460 = vsub.s32 4, %v436
  %v461 = vsel %vm376, %v460, %v436
  %v462 = vsel %vm375, %v371, %v459
  %v463 = vsel %vm375, 0, %v461
  %v464 = vcosq.f32.pop %v462
  %v465 = vsinq.f32.pop %v462
  %vm466 = vweird.f32 %v371
  %v467 = vadd.s32 %v463, 3
  %v468 = vand.u32 %v467, 3
  %vm469 = vcmp.lt.s32.totalorder %v468, 2
  %vm470 = vcmp.eq.s32.totalorder %v468, 0
  %v471 = vxor.u32 %v465, 2147483648
  %v472 = vsel %vm470, %v464, %v471
  %vm473 = vcmp.eq.s32.totalorder %v468, 2
  %v474 = vxor.u32 %v464, 2147483648
  %v475 = vsel %vm473, %v474, %v465
  %v476 = vsel %vm469, %v472, %v475
  %v477 = vsel %vm466, nan, %v476
  %v478 = vand.u32 2147483647, %v372
  %vm479 = vcmp.le.f32.partialorder %v478, 0.7853982
  %vm480 = vcmp.lt.s32.totalorder %v372, 0
  %v481 = vand.u32 %v372, 2139095040
  %v482 = vshrl.u32 %v481, 23
  %v483 = vsub.s32 %v482, 127
  %v484 = vand.u32 2147483647, %v372
  %v485 = vand.u32 %v484, 8388607
  %v486 = vor.u32 %v485, 8388608
  %v487 = vsub.s32 0, %v486
  %v488 = vadd.s32 %v483, 1
  %vm489 = vcmp.gt.s32.totalorder %v488, 0
  %v490 = vsel %vm489, %v488, 0
  %v491 = vshrl.u32 %v490, 5
  %v492 = vand.u32 %v490, 31
  %v493 = vsub.s32 32, %v492
  %v494 = vshrl.u32 683565275, %v493
  %v495 = vshll.u32 683565275, %v492
  %v496 = vshrl.u32 2475754826, %v493
  %v497 = vor.u32 %v495, %v496
  %v498 = vshll.u32 2475754826, %v492
  %v499 = vshrl.u32 2131351028, %v493
  %v500 = vor.u32 %v498, %v499
  %v501 = vshll.u32 2131351028, %v492
  %v502 = vshrl.u32 2102212464, %v493
  %v503 = vor.u32 %v501, %v502
  %v504 = vshll.u32 2102212464, %v492
  %v505 = vshrl.u32 920167782, %v493
  %v506 = vor.u32 %v504, %v505
  %v507 = vshll.u32 920167782, %v492
  %v508 = vshrl.u32 1326507024, %v493
  %v509 = vor.u32 %v507, %v508
  %vm510 = vcmp.lt.s32.totalorder %v491, 1
  %vm511 = vcmp.lt.s32.totalorder %v491, 2
  %vm512 = vcmp.lt.s32.totalorder %v491, 3
  %vm513 = vcmp.lt.s32.totalorder %v491, 4
  %v514 = vsel %vm510, %v494, %v497
  %v515 = vsel %vm513, %v503, 2102212464
  %v516 = vsel %vm512, %v500, %v515
  %v517 = vsel %vm511, %v514, %v516
  %v518 = vsel %vm510, %v497, %v500
  %v519 = vsel %vm513, %v506, 920167782
  %v520 = vsel %vm512, %v503, %v519
  %v521 = vsel %vm511, %v518, %v520
  %v522 = vsel %vm510, %v500, %v503
  %v523 = vsel %vm513, %v509, 1326507024
  %v524 = vsel %vm512, %v506, %v523
  %v525 = vsel %vm511, %v522, %v524
  %v526 = vshll.u32 %v486, 8
  %v527 = vmul.u32.u64.compose %v526, %v525
  %v528 = vextract.low.u32 %v527
  %v529 = vextract.high.u32 %v527
  %v530 = vmul.u32.u64.compose %v526, %v521
  %v531 = vextract.low.u32 %v530
  %v532 = vextract.high.u32 %v530
  %v533 = vmul.u32 %v526, %v517
  %v534 = vadd.s32 %v529, %v531
  %vm535 = vc.u32 %v529, %v531
  %v536 = vadd.s32 %v532, 1
  %v537 = vsel %vm535, %v536, %v532
  %v538 = vadd.s32 %v533, %v537
  %v539 = vadd.s32 %v538, 536870912
  %v540 = vshrl.u32 %v539, 30
  %v541 = vshll.u32 %v540, 30
  %v542 = vsub.s32 %v538, %v541
  %vm543 = vcmp.lt.s32.totalorder %v542, 0
  %v544 = vsub.s32 0, %v542
  %v545 = vsel %vm543, %v544, %v542
  %v546 = vclz %v545
  %v547 = vsub.s32 %v546, 2
  %vm548 = vcmp.gt.s32.totalorder 0, %v547
  %v549 = vsel %vm548, 0, %v547
  %v550 = vsub.s32 32, %v549
  %v551 = vshll.u32 %v542, %v549
  %v552 = vshrl.u32 %v534, %v550
  %v553 = vor.u32 %v551, %v552
  %v554 = vsub.s32 4294967266, %v549
  %v555 = vadd.s32 %v554, 127
  %v556 = vshll.u32 %v555, 23
  %v557 = vor.u32 4788187, %v556
  %v558 = vand.u32 2147483647, %v557
  %v560 = vcvt.s32.f32 %v553
  %v561 = vmul.f32 %v560, %v558
  %v562 = vxor.u32 %v561, 2147483648
  %v563 = vsel %vm480, %v562, %v561
  %v564 = vsub.s32 4, %v540
  %v565 = vsel %vm480, %v564, %v540
  %v566 = vsel %vm479, %v372, %v563
  %v567 = vsel %vm479, 0, %v565
  %v568 = vcosq.f32.pop %v566
  %v569 = vsinq.f32.pop %v566
  %vm570 = vweird.f32 %v372
  %v571 = vadd.s32 %v567, 3
  %v572 = vand.u32 %v571, 3
  %vm573 = vcmp.lt.s32.totalorder %v572, 2
  %vm574 = vcmp.eq.s32.totalorder %v572, 0
  %v575 = vxor.u32 %v569, 2147483648
  %v576 = vsel %vm574, %v568, %v575
  %vm577 = vcmp.eq.s32.totalorder %v572, 2
  %v578 = vxor.u32 %v568, 2147483648
  %v579 = vsel %vm577, %v578, %v569
  %v580 = vsel %vm573, %v576, %v579
  %v581 = vsel %vm570, nan, %v580
  %v582 = vand.u32 2147483647, %v373
  %vm583 = vcmp.le.f32.partialorder %v582, 0.7853982
  %vm584 = vcmp.lt.s32.totalorder %v373, 0
  %v585 = vand.u32 %v373, 2139095040
  %v586 = vshrl.u32 %v585, 23
  %v587 = vsub.s32 %v586, 127
  %v588 = vand.u32 2147483647, %v373
  %v589 = vand.u32 %v588, 8388607
  %v590 = vor.u32 %v589, 8388608
  %v591 = vsub.s32 0, %v590
  %v592 = vadd.s32 %v587, 1
  %vm593 = vcmp.gt.s32.totalorder %v592, 0
  %v594 = vsel %vm593, %v592, 0
  %v595 = vshrl.u32 %v594, 5
  %v596 = vand.u32 %v594, 31
  %v597 = vsub.s32 32, %v596
  %v598 = vshrl.u32 683565275, %v597
  %v599 = vshll.u32 683565275, %v596
  %v600 = vshrl.u32 2475754826, %v597
  %v601 = vor.u32 %v599, %v600
  %v602 = vshll.u32 2475754826, %v596
  %v603 = vshrl.u32 2131351028, %v597
  %v604 = vor.u32 %v602, %v603
  %v605 = vshll.u32 2131351028, %v596
  %v606 = vshrl.u32 2102212464, %v597
  %v607 = vor.u32 %v605, %v606
  %v608 = vshll.u32 2102212464, %v596
  %v609 = vshrl.u32 920167782, %v597
  %v610 = vor.u32 %v608, %v609
  %v611 = vshll.u32 920167782, %v596
  %v612 = vshrl.u32 1326507024, %v597
  %v613 = vor.u32 %v611, %v612
  %vm614 = vcmp.lt.s32.totalorder %v595, 1
  %vm615 = vcmp.lt.s32.totalorder %v595, 2
  %vm616 = vcmp.lt.s32.totalorder %v595, 3
  %vm617 = vcmp.lt.s32.totalorder %v595, 4
  %v618 = vsel %vm614, %v598, %v601
  %v619 = vsel %vm617, %v607, 2102212464
  %v620 = vsel %vm616, %v604, %v619
  %v621 = vsel %vm615, %v618, %v620
  %v622 = vsel %vm614, %v601, %v604
  %v623 = vsel %vm617, %v610, 920167782
  %v624 = vsel %vm616, %v607, %v623
  %v625 = vsel %vm615, %v622, %v624
  %v626 = vsel %vm614, %v604, %v607
  %v627 = vsel %vm617, %v613, 1326507024
  %v628 = vsel %vm616, %v610, %v627
  %v629 = vsel %vm615, %v626, %v628
  %v630 = vshll.u32 %v590, 8
  %v631 = vmul.u32.u64.compose %v630, %v629
  %v632 = vextract.low.u32 %v631
  %v633 = vextract.high.u32 %v631
  %v634 = vmul.u32.u64.compose %v630, %v625
  %v635 = vextract.low.u32 %v634
  %v636 = vextract.high.u32 %v634
  %v637 = vmul.u32 %v630, %v621
  %v638 = vadd.s32 %v633, %v635
  %vm639 = vc.u32 %v633, %v635
  %v640 = vadd.s32 %v636, 1
  %v641 = vsel %vm639, %v640, %v636
  %v642 = vadd.s32 %v637, %v641
  %v643 = vadd.s32 %v642, 536870912
  %v644 = vshrl.u32 %v643, 30
  %v645 = vshll.u32 %v644, 30
  %v646 = vsub.s32 %v642, %v645
  %vm647 = vcmp.lt.s32.totalorder %v646, 0
  %v648 = vsub.s32 0, %v646
  %v649 = vsel %vm647, %v648, %v646
  %v650 = vclz %v649
  %v651 = vsub.s32 %v650, 2
  %vm652 = vcmp.gt.s32.totalorder 0, %v651
  %v653 = vsel %vm652, 0, %v651
  %v654 = vsub.s32 32, %v653
  %v655 = vshll.u32 %v646, %v653
  %v656 = vshrl.u32 %v638, %v654
  %v657 = vor.u32 %v655, %v656
  %v658 = vsub.s32 4294967266, %v653
  %v659 = vadd.s32 %v658, 127
  %v660 = vshll.u32 %v659, 23
  %v661 = vor.u32 4788187, %v660
  %v662 = vand.u32 2147483647, %v661
  %v664 = vcvt.s32.f32 %v657
  %v665 = vmul.f32 %v664, %v662
  %v666 = vxor.u32 %v665, 2147483648
  %v667 = vsel %vm584, %v666, %v665
  %v668 = vsub.s32 4, %v644
  %v669 = vsel %vm584, %v668, %v644
  %v670 = vsel %vm583, %v373, %v667
  %v671 = vsel %vm583, 0, %v669
  %v672 = vcosq.f32.pop %v670
  %v673 = vsinq.f32.pop %v670
  %vm674 = vweird.f32 %v373
  %v675 = vadd.s32 %v671, 3
  %v676 = vand.u32 %v675, 3
  %vm677 = vcmp.lt.s32.totalorder %v676, 2
  %vm678 = vcmp.eq.s32.totalorder %v676, 0
  %v679 = vxor.u32 %v673, 2147483648
  %v680 = vsel %vm678, %v672, %v679
  %vm681 = vcmp.eq.s32.totalorder %v676, 2
  %v682 = vxor.u32 %v672, 2147483648
  %v683 = vsel %vm681, %v682, %v673
  %v684 = vsel %vm677, %v680, %v683
  %v685 = vsel %vm674, nan, %v684
  %v686 = vadd.f32 %v325, %v477
  %v687 = vadd.f32 %v326, %v581
  %v688 = vadd.f32 %v327, %v685
  %v689 = vld [vmem:[%s1 + $0x80] sm:$0xff]
  %v690 = vld [vmem:[%s1 + $0x88] sm:$0xff]
  %v691 = vld [vmem:[%s1 + $0x90] sm:$0xf]
  %v692 = vld [vmem:[%s1 + $0x98] sm:$0xff]
  %v693 = vld [vmem:[%s1 + $0xa0] sm:$0xff]
  %v694 = vld [vmem:[%s1 + $0xa8] sm:$0xf]
  %v695 = vld [vmem:[%s2 + $0x30] sm:$0xff]
  %v696 = vld [vmem:[%s2 + $0x38] sm:$0x7f]
  %v697 = vld [vmem:[%s1 + $0xb0] sm:$0xff]
  %v698 = vld [vmem:[%s1 + $0xb8] sm:$0x7f]
  %700 = vset.pattern.permute.xlu0 0
  %701 = vperm.xlu0 %700, %v689
  %v702 = vpop.permute.xlu0 %701
  %705 = vset.pattern.permute.xlu0 0
  %706 = vperm.xlu0 %705, %v690
  %v707 = vpop.permute.xlu0 %706
  %710 = vset.pattern.permute.xlu0 0
  %711 = vperm.xlu0 %710, %v691
  %v712 = vpop.permute.xlu0 %711
  %v714 = vmul.f32 %v686, %v702
  %v715 = vmul.f32 %v687, %v707
  %v716 = vmul.f32 %v688, %v712
  %718 = vset.pattern.permute.xlu0 0
  %719 = vperm.xlu0 %718, %v692
  %v720 = vpop.permute.xlu0 %719
  %723 = vset.pattern.permute.xlu0 0
  %724 = vperm.xlu0 %723, %v693
  %v725 = vpop.permute.xlu0 %724
  %728 = vset.pattern.permute.xlu0 0
  %729 = vperm.xlu0 %728, %v694
  %v730 = vpop.permute.xlu0 %729
  %v732 = vadd.f32 %v714, %v720
  %v733 = vadd.f32 %v715, %v725
  %v734 = vadd.f32 %v716, %v730
  %v735 = vmax.f32 %v732, 0.0
  %v736 = vmax.f32 %v733, 0.0
  %v737 = vmax.f32 %v734, 0.0
  %739 = vset.pattern.permute.xlu0 0
  %740 = vperm.xlu0 %739, %v697
  %v741 = vpop.permute.xlu0 %740
  %744 = vset.pattern.permute.xlu0 0
  %745 = vperm.xlu0 %744, %v698
  %v746 = vpop.permute.xlu0 %745
  %v749 = vsel %vm231, %v695, 0
  %v752 = vsel %vm231, %v696, 0
  %v755 = vsel %vm241, %v737, 0
  %757 = vmatprep.subr.mxu0 0.0
  %758 = vmatpush1.msra.mxu0 0.0
  %759 = vmatprep.subr.mxu0 0.0
  %760 = vmatpush1.msra.mxu0 0.0
  %761 = vmatprep.subr.mxu0 0.0
  %762 = vmatpush1.msra.mxu0 0.0
  %763 = vmatprep.subr.mxu0 0.0
  %764 = vmatpush1.msra.mxu0 0.0
  %765 = vmatprep.subr.mxu0 0.0
  %766 = vmatpush1.msra.mxu0 0.0
  %767 = vmatprep.subr.mxu0 0.0
  %768 = vmatpush1.msra.mxu0 0.0
  %769 = vmatprep.subr.mxu0 0.0
  %770 = vmatpush1.msra.mxu0 0.0
  %771 = vmatprep.subr.mxu0 0.0
  %772 = vmatpush1.msra.mxu0 0.0
  %773 = vmatprep.subr.mxu0 0.0
  %774 = vmatpush1.msra.mxu0 0.0
  %775 = vmatprep.subr.mxu0 0.0
  %776 = vmatpush1.msra.mxu0 0.0
  %777 = vmatprep.subr.mxu0 0.0
  %778 = vmatpush1.msra.mxu0 0.0
  %779 = vmatprep.subr.mxu0 0.0
  %780 = vmatpush1.msra.mxu0 0.0
  %781 = vmatprep.subr.mxu0 0.0
  %782 = vmatpush1.msra.mxu0 0.0
  %783 = vmatprep.subr.mxu0 0.0
  %784 = vmatpush1.msra.mxu0 %v755
  %785 = vmatprep.subr.mxu0 0.0
  %786 = vmatpush1.msra.mxu0 %v736
  %787 = vmatprep.subr.mxu0 0.0
  %788 = vmatpush1.msra.mxu0 %v735
  %789 = vmatprep.subr.mxu0 0.0
  %790 = vmatpush2.msra.mxu0 0.0
  %791 = vmatprep.subr.mxu0 0.0
  %792 = vmatpush2.msra.mxu0 0.0
  %793 = vmatprep.subr.mxu0 0.0
  %794 = vmatpush2.msra.mxu0 0.0
  %795 = vmatprep.subr.mxu0 0.0
  %796 = vmatpush2.msra.mxu0 0.0
  %797 = vmatprep.subr.mxu0 0.0
  %798 = vmatpush2.msra.mxu0 0.0
  %799 = vmatprep.subr.mxu0 0.0
  %800 = vmatpush2.msra.mxu0 0.0
  %801 = vmatprep.subr.mxu0 0.0
  %802 = vmatpush2.msra.mxu0 0.0
  %803 = vmatprep.subr.mxu0 0.0
  %804 = vmatpush2.msra.mxu0 0.0
  %805 = vmatprep.subr.mxu0 0.0
  %806 = vmatpush2.msra.mxu0 0.0
  %807 = vmatprep.subr.mxu0 0.0
  %808 = vmatpush2.msra.mxu0 0.0
  %809 = vmatprep.subr.mxu0 0.0
  %810 = vmatpush2.msra.mxu0 0.0
  %811 = vmatprep.subr.mxu0 0.0
  %812 = vmatpush2.msra.mxu0 0.0
  %813 = vmatprep.subr.mxu0 0.0
  %814 = vmatpush2.msra.mxu0 0.0
  %815 = vmatprep.subr.mxu0 0.0
  %816 = vmatpush2.msra.mxu0 0.0
  %817 = vmatprep.subr.mxu0 0.0
  %818 = vmatpush2.msra.mxu0 0.0
  %819 = vmatprep.subr.mxu0 0.0
  %820 = vmatpush2.msra.mxu0 0.0
  %821 = vmatprep.mubr.f32.mxu0 0.0
  %822 = vmatmul.mubr.f32.gmra.mxu0 %v749
  %v823 = vpop.f32.mrf.mxu0
  %v824 = vadd.f32 %v741, %v823
  %v825 = vpop.f32.mrf.mxu0
  %826 = vmatprep.mubr.f32.mxu0 0.0
  %827 = vmatmul.mubr.f32.gmra.mxu0 %v752
  %v828 = vpop.f32.mrf.mxu0
  %v829 = vadd.f32 %v746, %v828
  %v830 = vpop.f32.mrf.mxu0
  %831 = vdwg.mxu0
  %v832 = vld [vmem:[%s2 + $0x40] sm:$0xf]
  %v833 = vld [vmem:[%s1 + $0xc0] sm:$0xf]
  %835 = vset.pattern.permute.xlu0 0
  %836 = vperm.xlu0 %835, %v833
  %v837 = vpop.permute.xlu0 %836
  %v840 = vsel %vm71, %v832, 0
  %v843 = vsel %vm81, %v829, 0
  %845 = vmatprep.subr.mxu0 0.0
  %846 = vmatpush1.msra.mxu0 0.0
  %847 = vmatprep.subr.mxu0 0.0
  %848 = vmatpush1.msra.mxu0 0.0
  %849 = vmatprep.subr.mxu0 0.0
  %850 = vmatpush1.msra.mxu0 0.0
  %851 = vmatprep.subr.mxu0 0.0
  %852 = vmatpush1.msra.mxu0 0.0
  %853 = vmatprep.subr.mxu0 0.0
  %854 = vmatpush1.msra.mxu0 0.0
  %855 = vmatprep.subr.mxu0 0.0
  %856 = vmatpush1.msra.mxu0 0.0
  %857 = vmatprep.subr.mxu0 0.0
  %858 = vmatpush1.msra.mxu0 0.0
  %859 = vmatprep.subr.mxu0 0.0
  %860 = vmatpush1.msra.mxu0 0.0
  %861 = vmatprep.subr.mxu0 0.0
  %862 = vmatpush1.msra.mxu0 0.0
  %863 = vmatprep.subr.mxu0 0.0
  %864 = vmatpush1.msra.mxu0 0.0
  %865 = vmatprep.subr.mxu0 0.0
  %866 = vmatpush1.msra.mxu0 0.0
  %867 = vmatprep.subr.mxu0 0.0
  %868 = vmatpush1.msra.mxu0 0.0
  %869 = vmatprep.subr.mxu0 0.0
  %870 = vmatpush1.msra.mxu0 0.0
  %871 = vmatprep.subr.mxu0 0.0
  %872 = vmatpush1.msra.mxu0 0.0
  %873 = vmatprep.subr.mxu0 0.0
  %874 = vmatpush1.msra.mxu0 %v843
  %875 = vmatprep.subr.mxu0 0.0
  %876 = vmatpush1.msra.mxu0 %v824
  %877 = vmatprep.subr.mxu0 0.0
  %878 = vmatpush2.msra.mxu0 0.0
  %879 = vmatprep.subr.mxu0 0.0
  %880 = vmatpush2.msra.mxu0 0.0
  %881 = vmatprep.subr.mxu0 0.0
  %882 = vmatpush2.msra.mxu0 0.0
  %883 = vmatprep.subr.mxu0 0.0
  %884 = vmatpush2.msra.mxu0 0.0
  %885 = vmatprep.subr.mxu0 0.0
  %886 = vmatpush2.msra.mxu0 0.0
  %887 = vmatprep.subr.mxu0 0.0
  %888 = vmatpush2.msra.mxu0 0.0
  %889 = vmatprep.subr.mxu0 0.0
  %890 = vmatpush2.msra.mxu0 0.0
  %891 = vmatprep.subr.mxu0 0.0
  %892 = vmatpush2.msra.mxu0 0.0
  %893 = vmatprep.subr.mxu0 0.0
  %894 = vmatpush2.msra.mxu0 0.0
  %895 = vmatprep.subr.mxu0 0.0
  %896 = vmatpush2.msra.mxu0 0.0
  %897 = vmatprep.subr.mxu0 0.0
  %898 = vmatpush2.msra.mxu0 0.0
  %899 = vmatprep.subr.mxu0 0.0
  %900 = vmatpush2.msra.mxu0 0.0
  %901 = vmatprep.subr.mxu0 0.0
  %902 = vmatpush2.msra.mxu0 0.0
  %903 = vmatprep.subr.mxu0 0.0
  %904 = vmatpush2.msra.mxu0 0.0
  %905 = vmatprep.subr.mxu0 0.0
  %906 = vmatpush2.msra.mxu0 0.0
  %907 = vmatprep.subr.mxu0 0.0
  %908 = vmatpush2.msra.mxu0 0.0
  %909 = vmatprep.mubr.f32.mxu0 0.0
  %910 = vmatmul.mubr.f32.gmra.mxu0 %v840
  %v911 = vpop.f32.mrf.mxu0
  %v912 = vadd.f32 %v837, %v911
  %v913 = vpop.f32.mrf.mxu0
  %914 = vdwg.mxu0
  %915 = vst [vmem:[%s3] sm:$0xf] %v912
  // Predicated region
  $region14: #{gate_variational_encoder_forward.1} parent=0 // pred_check
    _
  $region15: #{gate_variational_encoder_forward.1} parent=0 // pred_check_branch
    %917 = sbr.rel (0) target = $region17
  $region16: #{gate_variational_encoder_forward.1} parent=0 // pred_region
    _
  $region17: #{gate_variational_encoder_forward.1} parent=0 // pred_fallthru
    _
  // Predicated region
  $region18: #{gate_variational_encoder_forward.1} parent=0 // pred_check
    _
  $region19: #{gate_variational_encoder_forward.1} parent=0 // pred_check_branch
    %919 = sbr.rel (0) target = $region21
  $region20: #{gate_variational_encoder_forward.1} parent=0 // pred_region
    _
  $region21: #{gate_variational_encoder_forward.1} parent=0 // pred_fallthru
    _

</llo_original>
